<compile_context>
chip_gen: v6e
topology: v6e:2x2x1
jax: 0.10.0
libtpu: 0.0.40
codegen_flags: <defaults>
</compile_context>

<pallas_src>
from functools import partial

import jax
import jax.numpy as jnp
from jax.experimental import pallas as pl
from jax.experimental.pallas import tpu as pltpu


def _preencoded1d_kernel(cont_ref, cat_ref, scale_ref, shift_ref, out_ref,
                         *, batch_norm: bool):
    """Per-batch-tile: (optional) folded-BN affine on continuous + concat, one store."""
    cont = cont_ref[...]
    if batch_norm:
        # scale/shift are precomputed from full-batch statistics in the wrapper,
        # so the per-tile work is a single fused multiply-add per element (VPU).
        cont = cont.astype(jnp.float32) * scale_ref[...] + shift_ref[...]

    # Build the whole (block_rows, c_total) output tile in registers and store it
    # once.  The in-register concat lands in XLU/VPU slots (which have slack),
    # keeping the saturating vst slot to a single unmasked-as-possible store.
    tile = jnp.concatenate(
        [cont.astype(out_ref.dtype), cat_ref[...].astype(out_ref.dtype)], axis=1)
    out_ref[...] = tile
    # TODO(synk): embedding_dropout > 0 (training dropout) would need
    # pltpu.prng_seed / prng_random_bits; the module builds no dropout for p == 0.
    # TODO(synk): virtual_batch_size (GhostBatchNorm) not implemented; plain BN stats.
    # TODO(synk): lane-dense output packing ((B*c_total//128, 128) slab + free
    # wrapper reshape) would remove the remaining 16/128-lane store amplification;
    # benchmark vs. this single-store version since it costs extra XLU shuffles.


def _sublane_pack(dtype) -> int:
    """Sublane packing factor: 8 for 32-bit, 16 for bf16/f16, 32 for 8-bit dtypes."""
    return max(8, 32 // jnp.dtype(dtype).itemsize)


def _vmem_budget_bytes() -> int:
    """Generation-aware budget for the double-buffered batch tiles."""
    cap = 64 << 20
    try:
        info = pltpu.get_tpu_info()
        cap = int(getattr(info, "vmem_capacity_bytes", cap) or cap)
    except Exception:
        pass
    if cap <= (64 << 20):        # v7x: 64 MiB physical VMEM / 32 MiB default scoped
        return 16 << 20
    return 32 << 20              # v5e / v6e: 128 MiB physical VMEM


def _choose_block_rows(batch, c_cont, c_cat, dtype, vmem_budget_bytes):
    """Largest batch tile whose double-buffered footprint fits the budget,
    rounded to the dtype's sublane packing, capped at 32K rows, and further
    capped so the grid has >= 4 steps whenever the batch allows it (keeps both
    v7x TensorCores busy and the DMA pipeline warm on all generations)."""
    itemsize = jnp.dtype(dtype).itemsize
    pack = _sublane_pack(dtype)
    c_total = c_cont + c_cat
    bytes_per_row = 2 * (c_cont + c_cat + c_total) * itemsize   # x2: double buffering
    rows = int(vmem_budget_bytes // max(bytes_per_row, 1))
    rows = min(rows, 32768)

    if batch >= 4 * pack:
        per_step = -(-batch // 4)                 # cdiv(batch, 4)
        per_step = -(-per_step // pack) * pack    # round up to sublane packing
        rows = min(rows, per_step)                # guarantee >= 4 grid steps

    rows = max(pack, (rows // pack) * pack)
    if rows >= batch:
        return batch                              # block == full dim is always legal
    return rows


def preencoded1d_forward(continuous, categorical, gamma, beta,
                         *, batch_norm_continuous_input=True,
                         eps=1e-5, block_rows=None):
    b, c_cont = continuous.shape
    b2, c_cat = categorical.shape
    assert b == b2, "batch dims must match"
    assert c_cont > 0 and c_cat > 0, (
        "Pallas path expects both feature groups; 0-width cases reduce to the "
        "module returning the other tensor unchanged.")
    assert continuous.dtype == categorical.dtype, (
        "continuous/categorical dtypes must match (torch.cat would type-promote)")

    c_total = c_cont + c_cat
    out_dtype = continuous.dtype
    itemsize = jnp.dtype(out_dtype).itemsize

    # ---- Phase 1: full-batch BN statistics folded into scale/shift ---------
    gamma2 = jnp.reshape(gamma, (1, c_cont)).astype(jnp.float32)
    beta2 = jnp.reshape(beta, (1, c_cont)).astype(jnp.float32)
    if batch_norm_continuous_input:
        x32 = continuous.astype(jnp.float32)
        mean = jnp.mean(x32, axis=0, keepdims=True)                     # (1, C_cont)
        var = jnp.mean(jnp.square(x32 - mean), axis=0, keepdims=True)   # biased var
        inv_std = jax.lax.rsqrt(var + jnp.float32(eps))
        scale = gamma2 * inv_std
        shift = beta2 - mean * scale
    else:
        scale = jnp.ones((1, c_cont), jnp.float32)
        shift = jnp.zeros((1, c_cont), jnp.float32)
    # TODO(synk): when B*c_cont*4 fits on-chip, this stats reduce could be fused
    # into the Pallas call (continuous kept resident in VMEM) to cut its duplicate
    # HBM read (~15-19% of traffic at these widths); kept as an XLA reduce here to
    # preserve the fully-parallel batch grid (v7x megacore sharding).

    # ---- Phase 2: batch-tiled FMA + concat kernel ---------------------------
    vmem_budget = _vmem_budget_bytes()
    if block_rows is None:
        block_rows = _choose_block_rows(b, c_cont, c_cat, out_dtype, vmem_budget)
    grid = (pl.cdiv(b, block_rows),)

    kernel = partial(_preencoded1d_kernel, batch_norm=batch_norm_continuous_input)

    cost = pl.CostEstimate(
        flops=int(2 * b * c_cont) if batch_norm_continuous_input else 0,
        transcendentals=0,
        bytes_accessed=int((b * c_cont + b * c_cat + b * c_total) * itemsize
                           + 2 * c_cont * 4))

    return pl.pallas_call(
        kernel,
        out_shape=jax.ShapeDtypeStruct((b, c_total), out_dtype),
        grid=grid,
        in_specs=[
            pl.BlockSpec((block_rows, c_cont), lambda i: (i, 0)),
            pl.BlockSpec((block_rows, c_cat), lambda i: (i, 0)),
            pl.BlockSpec((1, c_cont), lambda i: (0, 0)),   # resident across grid
            pl.BlockSpec((1, c_cont), lambda i: (0, 0)),   # resident across grid
        ],
        out_specs=pl.BlockSpec((block_rows, c_total), lambda i: (i, 0)),
        compiler_params=pltpu.CompilerParams(
            dimension_semantics=("parallel",),                 # no cross-tile dependence
            vmem_limit_bytes=int(vmem_budget + (8 << 20))),    # consistent with budget
        cost_estimate=cost,
    )(continuous, categorical, scale, shift)


def reference_forward(continuous, categorical, gamma, beta,
                      *, batch_norm_continuous_input=True, eps=1e-5):
    cont = continuous.astype(jnp.float32)
    if batch_norm_continuous_input:
        mean = jnp.mean(cont, axis=0, keepdims=True)
        var = jnp.mean(jnp.square(cont - mean), axis=0, keepdims=True)
        cont = (jnp.reshape(gamma, (1, -1)) * (cont - mean) / jnp.sqrt(var + eps)
                + jnp.reshape(beta, (1, -1)))
    return jnp.concatenate([cont.astype(continuous.dtype), categorical], axis=1)


if __name__ == "__main__":
    key = jax.random.PRNGKey(0)
    k_cont, k_cat, k_gamma, k_beta = jax.random.split(key, 4)

    batch = 32
    continuous_dim = 6
    categorical_dim = 10   # pre-encoded categorical features (already floats)

    continuous = jax.random.normal(k_cont, (batch, continuous_dim), dtype=jnp.float32)
    categorical = jax.random.normal(k_cat, (batch, categorical_dim), dtype=jnp.float32)
    gamma = 1.0 + 0.1 * jax.random.normal(k_gamma, (1, continuous_dim), dtype=jnp.float32)
    beta = 0.1 * jax.random.normal(k_beta, (1, continuous_dim), dtype=jnp.float32)

    # Explicit block_rows=8 forces a 4-step grid at this small demo size so the
    # tiled / double-buffered path is exercised.
    out = jax.block_until_ready(
        preencoded1d_forward(continuous, categorical, gamma, beta,
                             batch_norm_continuous_input=True, block_rows=8))
    ref = reference_forward(continuous, categorical, gamma, beta,
                            batch_norm_continuous_input=True)
    assert out.shape == (batch, continuous_dim + categorical_dim), out.shape
    assert jnp.allclose(out, ref, atol=1e-5, rtol=1e-5), "mismatch vs reference (BN)"

    out_nobn = jax.block_until_ready(
        preencoded1d_forward(continuous, categorical, gamma, beta,
                             batch_norm_continuous_input=False, block_rows=8))
    ref_nobn = reference_forward(continuous, categorical, gamma, beta,
                                 batch_norm_continuous_input=False)
    assert jnp.allclose(out_nobn, ref_nobn, atol=1e-6), "mismatch vs reference (no-BN)"

    # Auto-sized tiling: the chooser enforces >= 4 grid steps (8 rows/step here).
    auto_rows = _choose_block_rows(batch, continuous_dim, categorical_dim,
                                   continuous.dtype, _vmem_budget_bytes())
    assert pl.cdiv(batch, auto_rows) >= 4, (auto_rows, batch)
    out_auto = jax.block_until_ready(
        preencoded1d_forward(continuous, categorical, gamma, beta,
                             batch_norm_continuous_input=True))
    assert jnp.allclose(out_auto, ref, atol=1e-5, rtol=1e-5), "mismatch (auto tiling)"

    print("KERNEL_OK")
</pallas_src>

<mosaic_0001>
module attributes {stable_mosaic.version = 11 : i64} {
  func.func @_preencoded1d_kernel(%arg0: i32, %arg1: memref<8x6xf32, #tpu.memory_space<vmem>>, %arg2: memref<8x10xf32, #tpu.memory_space<vmem>>, %arg3: memref<1x6xf32, #tpu.memory_space<vmem>>, %arg4: memref<1x6xf32, #tpu.memory_space<vmem>>, %arg5: memref<8x16xf32, #tpu.memory_space<vmem>>) attributes {dimension_semantics = [#tpu.dimension_semantics<parallel>], iteration_bounds = array<i64: 4>, scalar_prefetch = 0 : i64, scratch_operands = 0 : i64, tpu.core_type = #tpu.core_type<tc>, window_params = [{transform_indices = @transform_0, window_bounds = array<i64: 8, 6>}, {transform_indices = @transform_1, window_bounds = array<i64: 8, 10>}, {pipeline_mode = #tpu.pipeline_mode<synchronous>, transform_indices = @transform_2, window_bounds = array<i64: 1, 6>}, {pipeline_mode = #tpu.pipeline_mode<synchronous>, transform_indices = @transform_3, window_bounds = array<i64: 1, 6>}, {transform_indices = @transform_4, window_bounds = array<i64: 8, 16>}]} {
    %c0 = arith.constant 0 : index
    %c0_0 = arith.constant 0 : index
    %0 = vector.load %arg1[%c0, %c0_0] : memref<8x6xf32, #tpu.memory_space<vmem>>, vector<8x6xf32>
    %c0_1 = arith.constant 0 : index
    %c0_2 = arith.constant 0 : index
    %1 = vector.load %arg3[%c0_1, %c0_2] : memref<1x6xf32, #tpu.memory_space<vmem>>, vector<1x6xf32>
    %2 = vector.broadcast %1 : vector<1x6xf32> to vector<8x6xf32>
    %3 = arith.mulf %0, %2 : vector<8x6xf32>
    %c0_3 = arith.constant 0 : index
    %c0_4 = arith.constant 0 : index
    %4 = vector.load %arg4[%c0_3, %c0_4] : memref<1x6xf32, #tpu.memory_space<vmem>>, vector<1x6xf32>
    %5 = vector.broadcast %4 : vector<1x6xf32> to vector<8x6xf32>
    %6 = arith.addf %3, %5 : vector<8x6xf32>
    %c0_5 = arith.constant 0 : index
    %c0_6 = arith.constant 0 : index
    %7 = vector.load %arg2[%c0_5, %c0_6] : memref<8x10xf32, #tpu.memory_space<vmem>>, vector<8x10xf32>
    %8 = tpu.concatenate %6, %7 in 1 : vector<8x6xf32>, vector<8x10xf32> -> vector<8x16xf32>
    %c0_7 = arith.constant 0 : index
    %c0_8 = arith.constant 0 : index
    %9 = vector.load %arg5[%c0_7, %c0_8] : memref<8x16xf32, #tpu.memory_space<vmem>>, vector<8x16xf32>
    tpu.vector_store %arg5[%c0_7, %c0_8], %8 {strides = array<i32>} : memref<8x16xf32, #tpu.memory_space<vmem>>, vector<8x16xf32>,
    return
  }
  func.func @transform_0(%arg0: i32) -> (i32, i32) {
    %c0_i32 = arith.constant 0 : i32
    %c0_i32_0 = arith.constant 0 : i32
    return %arg0, %c0_i32 : i32, i32
  }
  func.func @transform_1(%arg0: i32) -> (i32, i32) {
    %c0_i32 = arith.constant 0 : i32
    %c0_i32_0 = arith.constant 0 : i32
    return %arg0, %c0_i32 : i32, i32
  }
  func.func @transform_2(%arg0: i32) -> (i32, i32) {
    %c0_i32 = arith.constant 0 : i32
    %c0_i32_0 = arith.constant 0 : i32
    %c0_i32_1 = arith.constant 0 : i32
    return %c0_i32, %c0_i32_0 : i32, i32
  }
  func.func @transform_3(%arg0: i32) -> (i32, i32) {
    %c0_i32 = arith.constant 0 : i32
    %c0_i32_0 = arith.constant 0 : i32
    %c0_i32_1 = arith.constant 0 : i32
    return %c0_i32, %c0_i32_0 : i32, i32
  }
  func.func @transform_4(%arg0: i32) -> (i32, i32) {
    %c0_i32 = arith.constant 0 : i32
    %c0_i32_0 = arith.constant 0 : i32
    return %arg0, %c0_i32 : i32, i32
  }
}

</mosaic_0001>

<llo_original>
// kernel: tpu_custom_call.1
$region0: #{tpu_custom_call.1}
  #allocation0 [shape = 'u32[]', space=smem, size = 0x4, offset = 0x4, fixed_abs, tag = 'smem constant byte address 0x4 - core index']
  #allocation1 [shape = 'u32[144,128]{1,0:T(1,128)}', space=vmem, size = 0x12000, scoped, tag = 'internal scratch']
  %s0 = inlined_call_operand.vmem [shape: f32[32,6], index: 0, kind: input, shape index: {}]
  %s1 = inlined_call_operand.vmem [shape: f32[32,10], index: 1, kind: input, shape index: {}]
  %s2 = inlined_call_operand.vmem [shape: f32[1,6], index: 2, kind: input, shape index: {}]
  %s3 = inlined_call_operand.vmem [shape: f32[1,6], index: 3, kind: input, shape index: {}]
  %s4 = inlined_call_operand.vmem [shape: f32[32,16], index: 4, kind: output, shape index: {}]
  %s5 = sld [smem:[#allocation0]]
  $region49: #{tpu_custom_call.1} parent=0
    _
  %s7 = ssub.s32 1, %s5
  %s8 = scalar_select 0, %s7, %s5
  loop: start=0, step=1, limit=6
  $region2: #{tpu_custom_call.1} parent=0 // loop_pre_header
    _
  $region3: #{tpu_custom_call.1} parent=0 // loop_header
    %s10 = sphi 0, %s14
    %p11 = scmp.ge.s32.totalorder %s10, 6
    %s20 = sphi 0, %s22
    %s23 = sphi 0, %s20
    %s24 = sphi 0, %s23
    %s40 = sphi 0, %s24
    %s46 = sphi 0, %s48
    %s49 = sphi 0, %s46
    %s50 = sphi 0, %s49
    %s66 = sphi 0, %s50
    %s70 = sphi 0, %s70
    %s72 = sphi 0, %s70
    %s73 = sphi 0, %s72
    %s87 = sphi 0, %s73
    %s91 = sphi 0, %s91
    %s93 = sphi 0, %s91
    %s94 = sphi 0, %s93
    %s108 = sphi 0, %s94
    %s114 = sphi 0, %s116
    %s117 = sphi 0, %s114
    %s118 = sphi 0, %s117
    %s134 = sphi 0, %s118
  $region4: #{tpu_custom_call.1} parent=0 // loop_header_branch
    %13 = sbr.rel (%p11) target = $region8
  $region5: #{tpu_custom_call.1} parent=0 // loop_body
    %s15 = ssub.s32 %s10, 1
    %s16 = ssub.s32 %s10, 2
    %s17 = sadd.s32 %s10, 1
    %s18 = ssub.s32 %s10, %s17
    %p19 = scmp.eq.s32.totalorder %s18, 0
    %s21 = sadd.s32 %s20, 1
    %s22 = scalar_select %p19, %s20, %s21
    %p25 = pneg %p19
    %p26 = scmp.eq.s32.totalorder %s10, 3
    %p27 = por %p25, %p26
    %p28 = scmp.ne.s32.totalorder %s20, %s23
    %p29 = scmp.eq.s32.totalorder %s10, 0
    %p30 = por %p28, %p29
    %p31 = scmp.ne.s32.totalorder %s20, %s23
    %p32 = scmp.eq.s32.totalorder %s15, 3
    %p33 = por %p31, %p32
    %p34 = scmp.ne.s32.totalorder %s23, %s24
    %p35 = scmp.eq.s32.totalorder %s15, 0
    %p36 = por %p34, %p35
    %p37 = scmp.ne.s32.totalorder %s23, %s24
    %p38 = scmp.eq.s32.totalorder %s16, 3
    %p39 = por %p37, %p38
    %p41 = scmp.ne.s32.totalorder %s24, %s40
    %p42 = scmp.eq.s32.totalorder %s16, 0
    %p43 = por %p41, %p42
    %s44 = ssub.s32 %s10, %s17
    %p45 = scmp.eq.s32.totalorder %s44, 0
    %s47 = sadd.s32 %s46, 1
    %s48 = scalar_select %p45, %s46, %s47
    %p51 = pneg %p45
    %p52 = scmp.eq.s32.totalorder %s10, 3
    %p53 = por %p51, %p52
    %p54 = scmp.ne.s32.totalorder %s46, %s49
    %p55 = scmp.eq.s32.totalorder %s10, 0
    %p56 = por %p54, %p55
    %p57 = scmp.ne.s32.totalorder %s46, %s49
    %p58 = scmp.eq.s32.totalorder %s15, 3
    %p59 = por %p57, %p58
    %p60 = scmp.ne.s32.totalorder %s49, %s50
    %p61 = scmp.eq.s32.totalorder %s15, 0
    %p62 = por %p60, %p61
    %p63 = scmp.ne.s32.totalorder %s49, %s50
    %p64 = scmp.eq.s32.totalorder %s16, 3
    %p65 = por %p63, %p64
    %p67 = scmp.ne.s32.totalorder %s50, %s66
    %p68 = scmp.eq.s32.totalorder %s16, 0
    %p69 = por %p67, %p68
    %s71 = sadd.s32 %s70, 1
    %p74 = scmp.eq.s32.totalorder %s10, 3
    %p75 = scmp.ne.s32.totalorder %s70, %s72
    %p76 = scmp.eq.s32.totalorder %s10, 0
    %p77 = por %p75, %p76
    %p78 = scmp.ne.s32.totalorder %s70, %s72
    %p79 = scmp.eq.s32.totalorder %s15, 3
    %p80 = por %p78, %p79
    %p81 = scmp.ne.s32.totalorder %s72, %s73
    %p82 = scmp.eq.s32.totalorder %s15, 0
    %p83 = por %p81, %p82
    %p84 = scmp.ne.s32.totalorder %s72, %s73
    %p85 = scmp.eq.s32.totalorder %s16, 3
    %p86 = por %p84, %p85
    %p88 = scmp.ne.s32.totalorder %s73, %s87
    %p89 = scmp.eq.s32.totalorder %s16, 0
    %p90 = por %p88, %p89
    %s92 = sadd.s32 %s91, 1
    %p95 = scmp.eq.s32.totalorder %s10, 3
    %p96 = scmp.ne.s32.totalorder %s91, %s93
    %p97 = scmp.eq.s32.totalorder %s10, 0
    %p98 = por %p96, %p97
    %p99 = scmp.ne.s32.totalorder %s91, %s93
    %p100 = scmp.eq.s32.totalorder %s15, 3
    %p101 = por %p99, %p100
    %p102 = scmp.ne.s32.totalorder %s93, %s94
    %p103 = scmp.eq.s32.totalorder %s15, 0
    %p104 = por %p102, %p103
    %p105 = scmp.ne.s32.totalorder %s93, %s94
    %p106 = scmp.eq.s32.totalorder %s16, 3
    %p107 = por %p105, %p106
    %p109 = scmp.ne.s32.totalorder %s94, %s108
    %p110 = scmp.eq.s32.totalorder %s16, 0
    %p111 = por %p109, %p110
    %s112 = ssub.s32 %s10, %s17
    %p113 = scmp.eq.s32.totalorder %s112, 0
    %s115 = sadd.s32 %s114, 1
    %s116 = scalar_select %p113, %s114, %s115
    %p119 = pneg %p113
    %p120 = scmp.eq.s32.totalorder %s10, 3
    %p121 = por %p119, %p120
    %p122 = scmp.ne.s32.totalorder %s114, %s117
    %p123 = scmp.eq.s32.totalorder %s10, 0
    %p124 = por %p122, %p123
    %p125 = scmp.ne.s32.totalorder %s114, %s117
    %p126 = scmp.eq.s32.totalorder %s15, 3
    %p127 = por %p125, %p126
    %p128 = scmp.ne.s32.totalorder %s117, %s118
    %p129 = scmp.eq.s32.totalorder %s15, 0
    %p130 = por %p128, %p129
    %p131 = scmp.ne.s32.totalorder %s117, %s118
    %p132 = scmp.eq.s32.totalorder %s16, 3
    %p133 = por %p131, %p132
    %p135 = scmp.ne.s32.totalorder %s118, %s134
    %p136 = scmp.eq.s32.totalorder %s16, 0
    %p137 = por %p135, %p136
    %p138 = scmp.le.s32.totalorder 1, %s10
    %p139 = scmp.lt.s32.totalorder %s10, 5
    %p140 = pnand %p138, %p139
    %p141 = pneg %p140
    // Predicated region
    $region9: #{tpu_custom_call.1} parent=5 // pred_check
      _
    $region10: #{tpu_custom_call.1} parent=5 // pred_check_branch
      %143 = sbr.rel (%p140) target = $region12
    $region11: #{tpu_custom_call.1} parent=5 // pred_region
      %s144 = ssub.s32 %s10, 1
      // Predicated region
      $region13: #{tpu_custom_call.1} parent=11 // pred_check
        %p145 = pneg %p83
      $region14: #{tpu_custom_call.1} parent=11 // pred_check_branch
        %147 = sbr.rel (%p145) target = $region16
      $region15: #{tpu_custom_call.1} parent=11 // pred_region
        _
      $region16: #{tpu_custom_call.1} parent=11 // pred_fallthru
        _
      // Predicated region
      $region17: #{tpu_custom_call.1} parent=11 // pred_check
        %p148 = pneg %p104
      $region18: #{tpu_custom_call.1} parent=11 // pred_check_branch
        %150 = sbr.rel (%p148) target = $region20
      $region19: #{tpu_custom_call.1} parent=11 // pred_region
        _
      $region20: #{tpu_custom_call.1} parent=11 // pred_fallthru
        _
    $region12: #{tpu_custom_call.1} parent=5 // pred_fallthru
      _
    %p151 = scmp.lt.s32.totalorder %s10, 4
    // Predicated region
    $region21: #{tpu_custom_call.1} parent=5 // pred_check
      %p152 = pneg %p151
    $region22: #{tpu_custom_call.1} parent=5 // pred_check_branch
      %154 = sbr.rel (%p152) target = $region24
    $region23: #{tpu_custom_call.1} parent=5 // pred_region
      // Predicated region
      $region25: #{tpu_custom_call.1} parent=23 // pred_check
        %p155 = pneg %p30
      $region26: #{tpu_custom_call.1} parent=23 // pred_check_branch
        %157 = sbr.rel (%p155) target = $region28
      $region27: #{tpu_custom_call.1} parent=23 // pred_region
        %p158 = scmp.lt.s32.totalorder %s10, 3
        %s159 = scalar_select %p158, %s10, 3
        %s160 = smul.addr %s159, 8
        %s161 = scalar_lea.vmem %s0, %s160
      $region28: #{tpu_custom_call.1} parent=23 // pred_fallthru
        _
      // Predicated region
      $region29: #{tpu_custom_call.1} parent=23 // pred_check
        %p162 = pneg %p56
      $region30: #{tpu_custom_call.1} parent=23 // pred_check_branch
        %164 = sbr.rel (%p162) target = $region32
      $region31: #{tpu_custom_call.1} parent=23 // pred_region
        %p165 = scmp.lt.s32.totalorder %s10, 3
        %s166 = scalar_select %p165, %s10, 3
        %s167 = smul.addr %s166, 8
        %s168 = scalar_lea.vmem %s1, %s167
      $region32: #{tpu_custom_call.1} parent=23 // pred_fallthru
        _
    $region24: #{tpu_custom_call.1} parent=5 // pred_fallthru
      _
    %p169 = scmp.le.s32.totalorder 1, %s10
    %p170 = scmp.lt.s32.totalorder %s10, 5
    %p171 = pnand %p169, %p170
    %p172 = pneg %p171
    // Predicated region
    $region33: #{tpu_custom_call.1} parent=5 // pred_check
      _
    $region34: #{tpu_custom_call.1} parent=5 // pred_check_branch
      %174 = sbr.rel (%p171) target = $region36
    $region35: #{tpu_custom_call.1} parent=5 // pred_region
      %s175 = ssub.s32 %s10, 1
      %p176 = scmp.lt.s32.totalorder %s15, 3
      %s177 = scalar_select %p176, %s15, 3
      %s178 = smul.addr %s177, 8
      %s179 = scalar_lea.vmem %s0, %s178
      %p180 = pneg %p36
      %p181 = pneg %p33
      %p182 = scmp.lt.s32.totalorder %s15, 3
      %s183 = scalar_select %p182, %s15, 3
      %s184 = smul.addr %s183, 8
      %s185 = scalar_lea.vmem %s1, %s184
      %p186 = pneg %p62
      %p187 = pneg %p59
      %p188 = pneg %p83
      %p189 = pneg %p80
      %p190 = pneg %p104
      %p191 = pneg %p101
      %p192 = pneg %p130
      %p193 = pneg %p127
      %p194 = scmp.lt.s32.totalorder %s15, 3
      %s195 = scalar_select %p194, %s15, 3
      %s196 = smul.addr %s195, 8
      %s197 = scalar_lea.vmem %s4, %s196
      %p198 = scmp.lt.s32.totalorder %s15, 3
      %s199 = scalar_select %p198, %s15, 3
      %s200 = smul.addr %s199, 8
      %s201 = scalar_lea.vmem %s0, %s200
      %p202 = scmp.lt.s32.totalorder %s15, 3
      %s203 = scalar_select %p202, %s15, 3
      %s204 = smul.addr %s203, 8
      %s205 = scalar_lea.vmem %s1, %s204
      %p206 = scmp.lt.s32.totalorder %s15, 3
      %s207 = scalar_select %p206, %s15, 3
      %s208 = smul.addr %s207, 8
      %s209 = scalar_lea.vmem %s4, %s208
      %v210 = vld [vmem:[%s201] sm:$0xff]
      %v211 = vld [vmem:[%s2] sm:$0x1]
      %v213 = vlaneseq
      %v214 = vshrl.u32 %v213, 7
      %v215 = vsub.s32 0, %v214
      %v216 = vrot.slane %v211, %v215
      %v218 = vmul.f32 %v210, %v216
      %v219 = vld [vmem:[%s3] sm:$0x1]
      %v221 = vlaneseq
      %v222 = vshrl.u32 %v221, 7
      %v223 = vsub.s32 0, %v222
      %v224 = vrot.slane %v219, %v223
      %v226 = vadd.f32 %v218, %v224
      %v227 = vld [vmem:[%s205] sm:$0xff]
      %229 = vrot.lane.b32.xlu0 %v227, 6
      %v230 = vpop.permute.xlu0 %229
      %vm232 = vcmask 48128
      %v233 = vsel %vm232, %v226, %v230
      %vm234 = vcmask 130048
      %235 = vst.msk [vmem:[%s209] sm:$0xff] %vm234, %v233
      %p236 = scmp.lt.s32.totalorder %s15, 3
      %s237 = scalar_select %p236, %s15, 3
      %s238 = smul.addr %s237, 8
      %s239 = scalar_lea.vmem %s4, %s238
      // Predicated region
      $region37: #{tpu_custom_call.1} parent=35 // pred_check
        %p240 = pneg %p127
      $region38: #{tpu_custom_call.1} parent=35 // pred_check_branch
        %242 = sbr.rel (%p240) target = $region40
      $region39: #{tpu_custom_call.1} parent=35 // pred_region
        _
      $region40: #{tpu_custom_call.1} parent=35 // pred_fallthru
        _
    $region36: #{tpu_custom_call.1} parent=5 // pred_fallthru
      _
    %p243 = scmp.le.s32.totalorder 2, %s10
    // Predicated region
    $region41: #{tpu_custom_call.1} parent=5 // pred_check
      %p244 = pneg %p243
    $region42: #{tpu_custom_call.1} parent=5 // pred_check_branch
      %246 = sbr.rel (%p244) target = $region44
    $region43: #{tpu_custom_call.1} parent=5 // pred_region
      %s247 = ssub.s32 %s10, 2
      // Predicated region
      $region45: #{tpu_custom_call.1} parent=43 // pred_check
        %p248 = pneg %p133
      $region46: #{tpu_custom_call.1} parent=43 // pred_check_branch
        %250 = sbr.rel (%p248) target = $region48
      $region47: #{tpu_custom_call.1} parent=43 // pred_region
        %p251 = scmp.lt.s32.totalorder %s16, 3
        %s252 = scalar_select %p251, %s16, 3
        %s253 = smul.addr %s252, 8
        %s254 = scalar_lea.vmem %s4, %s253
      $region48: #{tpu_custom_call.1} parent=43 // pred_fallthru
        _
    $region44: #{tpu_custom_call.1} parent=5 // pred_fallthru
      _
  $region6: #{tpu_custom_call.1} parent=0 // loop_footer
    %s14 = sadd.s32 1, %s10
  $region7: #{tpu_custom_call.1} parent=0 // loop_footer_branch
    %9 = sbr.rel target = $region3
  $region8: #{tpu_custom_call.1} parent=0 // loop_exit
    _

</llo_original>
